<compile_context>
chip_gen: v6e
topology: v6e:2x2x1
jax: 0.10.0
libtpu: 0.0.40
codegen_flags: <defaults>
</compile_context>

<pallas_src>
from functools import partial

import jax
import jax.numpy as jnp
import numpy as np
from jax.experimental import pallas as pl
from jax.experimental.pallas import tpu as pltpu


def _round_up(x, m):
    return ((x + m - 1) // m) * m


# -----------------------------------------------------------------------------
# Resident fused kernel: all GCN layers in one invocation (everything in VMEM).
#   refs = (p, x, w0, b0, w1, b1, ..., o)
#     p   : (Npad, Npad)                 bf16
#     x   : (Npad, Cpad0)                bf16
#     w_l : (Cpad_l, Cpad_{l+1})         bf16   (already transposed)
#     b_l : (1, Cpad_{l+1})              f32
#     o   : (Npad, Cpad_L)               x.dtype
# -----------------------------------------------------------------------------
def fused_gcn_kernel(*refs, num_layers, xw_first):
    p_ref, x_ref = refs[0], refs[1]
    o_ref = refs[-1]
    p = p_ref[...]                       # stays in VMEM across layers
    h = x_ref[...]
    for layer in range(num_layers):      # static unroll (num_layers is trace-time)
        w_ref = refs[2 + 2 * layer]
        b_ref = refs[3 + 2 * layer]
        if xw_first[layer]:
            # Cout_pad <= Cin_pad: transform first, aggregate at the narrow width.
            xw = jnp.dot(h, w_ref[...], preferred_element_type=jnp.float32)
            out = jnp.dot(p, xw.astype(jnp.bfloat16),
                          preferred_element_type=jnp.float32) + b_ref[...]
        else:
            # Cout_pad > Cin_pad: aggregate first at the narrow width, then transform.
            ph = jnp.dot(p, h, preferred_element_type=jnp.float32)
            out = jnp.dot(ph.astype(jnp.bfloat16), w_ref[...],
                          preferred_element_type=jnp.float32) + b_ref[...]
        if layer != num_layers - 1:
            h = jnp.maximum(out, 0.0).astype(jnp.bfloat16)
        else:
            o_ref[...] = out.astype(o_ref.dtype)   # unmasked lane-dense store


# -----------------------------------------------------------------------------
# Streamed-P path kernels (P lives in HBM; row tiles of P are auto-pipelined).
# -----------------------------------------------------------------------------
def _transform_kernel(h_ref, w_ref, o_ref):
    # XW = H @ W  (H, W resident; small output)
    o_ref[...] = jnp.dot(h_ref[...], w_ref[...],
                         preferred_element_type=jnp.float32).astype(o_ref.dtype)


def _aggregate_kernel(p_ref, xw_ref, b_ref, o_ref, *, relu):
    # O_tile = P_tile @ XW + b   (XW broadcast-resident across the row grid)
    out = jnp.dot(p_ref[...], xw_ref[...],
                  preferred_element_type=jnp.float32) + b_ref[...]
    if relu:
        out = jnp.maximum(out, 0.0)
    o_ref[...] = out.astype(o_ref.dtype)


def _fused_agg_transform_kernel(p_ref, h_ref, w_ref, b_ref, o_ref, *, relu):
    # O_tile = (P_tile @ H) @ W + b   (used when Cout_pad > Cin_pad)
    ph = jnp.dot(p_ref[...], h_ref[...], preferred_element_type=jnp.float32)
    out = jnp.dot(ph.astype(jnp.bfloat16), w_ref[...],
                  preferred_element_type=jnp.float32) + b_ref[...]
    if relu:
        out = jnp.maximum(out, 0.0)
    o_ref[...] = out.astype(o_ref.dtype)


def _streamed_forward(p_pad, x_pad, wts, bs, cpads, npad, out_dtype,
                      vmem_budget, xw_first):
    num_layers = len(wts)
    vmem_spec = pl.BlockSpec(memory_space=pltpu.MemorySpace.VMEM)

    # Row-tile size: largest {1024,512,256,128} dividing npad with a modest VMEM bill.
    tm = 128
    for cand in (1024, 512, 256):
        if npad % cand == 0 and cand * npad * 2 * 2 <= vmem_budget // 4:
            tm = cand
            break

    h = x_pad
    for layer in range(num_layers):
        cin_pad, cout_pad = cpads[layer], cpads[layer + 1]
        last = layer == num_layers - 1
        relu = not last
        out_dt = out_dtype if last else jnp.bfloat16

        if xw_first[layer]:
            # 1) XW once (H, W resident).
            xw = pl.pallas_call(
                _transform_kernel,
                out_shape=jax.ShapeDtypeStruct((npad, cout_pad), jnp.bfloat16),
                in_specs=[vmem_spec, vmem_spec],
                out_specs=vmem_spec,
                compiler_params=pltpu.CompilerParams(vmem_limit_bytes=vmem_budget),
            )(h, wts[layer])
            # 2) Stream P row tiles through the aggregation.
            h = pl.pallas_call(
                partial(_aggregate_kernel, relu=relu),
                out_shape=jax.ShapeDtypeStruct((npad, cout_pad), out_dt),
                grid=(npad // tm,),
                in_specs=[
                    pl.BlockSpec((tm, npad), lambda i: (i, 0)),
                    pl.BlockSpec((npad, cout_pad), lambda i: (0, 0)),
                    pl.BlockSpec((1, cout_pad), lambda i: (0, 0)),
                ],
                out_specs=pl.BlockSpec((tm, cout_pad), lambda i: (i, 0)),
                compiler_params=pltpu.CompilerParams(
                    dimension_semantics=("parallel",),
                    vmem_limit_bytes=vmem_budget),
            )(p_pad, xw, bs[layer])
        else:
            # Aggregate first (narrow Cin), transform in the same streamed kernel.
            h = pl.pallas_call(
                partial(_fused_agg_transform_kernel, relu=relu),
                out_shape=jax.ShapeDtypeStruct((npad, cout_pad), out_dt),
                grid=(npad // tm,),
                in_specs=[
                    pl.BlockSpec((tm, npad), lambda i: (i, 0)),
                    pl.BlockSpec((npad, cin_pad), lambda i: (0, 0)),
                    pl.BlockSpec((cin_pad, cout_pad), lambda i: (0, 0)),
                    pl.BlockSpec((1, cout_pad), lambda i: (0, 0)),
                ],
                out_specs=pl.BlockSpec((tm, cout_pad), lambda i: (i, 0)),
                compiler_params=pltpu.CompilerParams(
                    dimension_semantics=("parallel",),
                    vmem_limit_bytes=vmem_budget),
            )(p_pad, h, wts[layer], bs[layer])
    return h


# -----------------------------------------------------------------------------
# Glue: dense normalized adjacency (PyG gcn_norm, add_remaining_self_loops),
# built directly into the padded (npad, npad) buffer (single O(N^2) alloc).
# -----------------------------------------------------------------------------
def gcn_norm_dense_padded(edge_index, edge_weight, num_nodes, npad):
    src = edge_index[0]
    dst = edge_index[1]
    num_edges = src.shape[0]
    if edge_weight is None:
        edge_weight = jnp.ones((num_edges,), jnp.float32)
    w = edge_weight.astype(jnp.float32)

    # add_remaining_self_loops: drop existing self-loop edges; each node gets exactly one
    # self-loop (weight = existing loop weight if present, else 1).  Duplicate self-loop
    # edges for the same node keep the last-scattered weight (PyG edge case).
    is_loop = src == dst
    w_edges = jnp.where(is_loop, 0.0, w)                  # non-loop edges only
    loop_idx = jnp.where(is_loop, src, num_nodes)         # OOB index -> dropped
    loop_w = jnp.ones((num_nodes,), jnp.float32).at[loop_idx].set(w, mode="drop")

    # in-degree of (A + I)
    deg = jnp.zeros((num_nodes,), jnp.float32).at[dst].add(w_edges) + loop_w
    dinv = jnp.where(deg > 0, jax.lax.rsqrt(deg), 0.0)

    # P[dst, src] = dinv[src] * w * dinv[dst]   (out[dst] += norm * x[src])
    P = jnp.zeros((npad, npad), jnp.float32)
    P = P.at[dst, src].add(dinv[src] * w_edges * dinv[dst])
    diag = jnp.arange(num_nodes)
    P = P.at[diag, diag].add(dinv * dinv * loop_w)
    return P


# -----------------------------------------------------------------------------
# GNN_Multi_Layer forward (eval mode).
# -----------------------------------------------------------------------------
def gnn_multi_layer_forward(x, edge_index, edge_weight, params, *, force_streamed=False):
    num_nodes, in_channels = x.shape
    num_layers = len(params)
    out_channels = params[-1][0].shape[0]
    out_dtype = x.dtype

    chan_dims = [in_channels] + [w.shape[0] for (w, _) in params]
    cpads = [_round_up(c, 128) for c in chan_dims]      # per-layer lane-dense pads
    npad = _round_up(num_nodes, 128)

    # normalized adjacency (GCNConv cached=True would also build it once)
    p_pad = gcn_norm_dense_padded(edge_index, edge_weight, num_nodes, npad
                                  ).astype(jnp.bfloat16)

    x_pad = jnp.zeros((npad, cpads[0]), jnp.bfloat16).at[:num_nodes, :in_channels].set(
        x.astype(jnp.bfloat16))

    wts, bs = [], []
    for l, (w, b) in enumerate(params):
        cout, cin = w.shape
        wts.append(jnp.zeros((cpads[l], cpads[l + 1]), jnp.bfloat16)
                   .at[:cin, :cout].set(jnp.transpose(w).astype(jnp.bfloat16)))
        bs.append(jnp.zeros((1, cpads[l + 1]), jnp.float32)
                  .at[0, :cout].set(b.astype(jnp.float32)))

    # Per-layer association: aggregate at min(Cin_pad, Cout_pad).
    xw_first = tuple(cpads[l + 1] <= cpads[l] for l in range(num_layers))

    # Per-generation VMEM budget (~102 MiB on 128 MiB v5e/v6e, ~51 MiB on 64 MiB v7x).
    try:
        vmem_capacity = int(pltpu.get_tpu_info().vmem_capacity_bytes)
    except Exception:
        vmem_capacity = 64 * 1024 * 1024
    vmem_budget = int(0.80 * vmem_capacity)

    out_itemsize = jnp.dtype(out_dtype).itemsize
    in_bytes = (npad * npad * 2 + npad * cpads[0] * 2
                + sum(cpads[l] * cpads[l + 1] * 2 for l in range(num_layers))
                + sum(cpads[l + 1] * 4 for l in range(num_layers)))
    out_bytes = npad * cpads[-1] * out_itemsize
    max_c = max(cpads)
    # No grid => no input double-buffering; add live f32 intermediates + scratch margin.
    est = in_bytes + out_bytes + 3 * npad * max_c * 4 + (2 << 20)

    if (not force_streamed) and est <= vmem_budget:
        flops = sum(2 * npad * npad * min(cpads[l], cpads[l + 1])
                    + 2 * npad * cpads[l] * cpads[l + 1]
                    for l in range(num_layers))
        args = [p_pad, x_pad]
        for l in range(num_layers):
            args += [wts[l], bs[l]]
        vmem_spec = pl.BlockSpec(memory_space=pltpu.MemorySpace.VMEM)
        out_pad = pl.pallas_call(
            partial(fused_gcn_kernel, num_layers=num_layers, xw_first=xw_first),
            out_shape=jax.ShapeDtypeStruct((npad, cpads[-1]), out_dtype),
            in_specs=[vmem_spec] * len(args),
            out_specs=vmem_spec,
            compiler_params=pltpu.CompilerParams(vmem_limit_bytes=vmem_budget),
            cost_estimate=pl.CostEstimate(flops=int(flops), transcendentals=0,
                                          bytes_accessed=int(in_bytes + out_bytes)),
        )(*args)
    else:
        out_pad = _streamed_forward(p_pad, x_pad, wts, bs, cpads, npad,
                                    out_dtype, vmem_budget, xw_first)

    return out_pad[:num_nodes, :out_channels]


def init_params(key, in_channels, hidden_channels, out_channels, num_layers):
    """Deterministic glorot-uniform weights, zero bias (GCNConv init style)."""
    dims = []
    if num_layers == 1:
        dims.append((in_channels, out_channels))
    else:
        dims.append((in_channels, hidden_channels))
        for _ in range(num_layers - 2):
            dims.append((hidden_channels, hidden_channels))
        dims.append((hidden_channels, out_channels))
    params = []
    for i, (cin, cout) in enumerate(dims):
        k = jax.random.fold_in(key, i)
        limit = jnp.sqrt(6.0 / (cin + cout))
        w = jax.random.uniform(k, (cout, cin), jnp.float32, -limit, limit)
        b = jnp.zeros((cout,), jnp.float32)
        params.append((w, b))
    return params


def reference_forward(x, P, params):
    """Pure-JAX f32 reference of the same forward (for a sanity check)."""
    h = x.astype(jnp.float32)
    n = len(params)
    for idx, (w, b) in enumerate(params):
        h = P @ (h @ w.T) + b[None, :]
        if idx != n - 1:
            h = jnp.maximum(h, 0.0)
    return h


if __name__ == "__main__":
    key = jax.random.PRNGKey(0)
    k_x, k_src, k_dst, k_w, k_p = jax.random.split(key, 5)

    num_nodes = 64
    num_edges = 256
    num_classes = 16     # in_channels == out_channels == num_classes (logit correction)

    x = jax.random.normal(k_x, (num_nodes, num_classes), jnp.float32)
    src = jax.random.randint(k_src, (num_edges,), 0, num_nodes, jnp.int32)
    dst = jax.random.randint(k_dst, (num_edges,), 0, num_nodes, jnp.int32)
    edge_index = jnp.stack([src, dst], axis=0)          # (2, num_edges)
    edge_weight = jax.random.uniform(k_w, (num_edges,), jnp.float32, 0.5, 1.5)

    npad = _round_up(num_nodes, 128)
    P_ref = gcn_norm_dense_padded(edge_index, edge_weight, num_nodes, npad
                                  )[:num_nodes, :num_nodes]

    # Two configs: (a) narrow hidden (xw-first association everywhere),
    #              (b) wide hidden   (ph-first association on layer 0).
    configs = [
        dict(hidden_channels=32, num_layers=2),
        dict(hidden_channels=160, num_layers=3),
    ]
    for cfg in configs:
        params = init_params(k_p, num_classes, cfg["hidden_channels"],
                             num_classes, cfg["num_layers"])
        ref = reference_forward(x, P_ref, params)
        for force_streamed in (False, True):   # exercise both resident & streamed paths
            out = gnn_multi_layer_forward(x, edge_index, edge_weight, params,
                                          force_streamed=force_streamed)
            jax.block_until_ready(out)
            assert out.shape == (num_nodes, num_classes)
            # bf16 MXU inputs (P, W, intermediates) -> loose tolerance vs f32 reference
            np.testing.assert_allclose(np.asarray(out), np.asarray(ref),
                                       rtol=0.15, atol=0.15)

    print("KERNEL_OK")
</pallas_src>

<mosaic_0001>
module attributes {stable_mosaic.version = 11 : i64} {
  func.func @fused_gcn_kernel(%arg0: memref<128x128xbf16, #tpu.memory_space<vmem>>, %arg1: memref<128x128xbf16, #tpu.memory_space<vmem>>, %arg2: memref<128x128xbf16, #tpu.memory_space<vmem>>, %arg3: memref<1x128xf32, #tpu.memory_space<vmem>>, %arg4: memref<128x128xbf16, #tpu.memory_space<vmem>>, %arg5: memref<1x128xf32, #tpu.memory_space<vmem>>, %arg6: memref<128x128xf32, #tpu.memory_space<vmem>>) attributes {dimension_semantics = [], scalar_prefetch = 0 : i64, scratch_operands = 0 : i64, tpu.core_type = #tpu.core_type<tc>} {
    %c0 = arith.constant 0 : index
    %c0_0 = arith.constant 0 : index
    %0 = vector.load %arg0[%c0, %c0_0] : memref<128x128xbf16, #tpu.memory_space<vmem>>, vector<128x128xbf16>
    %c0_1 = arith.constant 0 : index
    %c0_2 = arith.constant 0 : index
    %1 = vector.load %arg1[%c0_1, %c0_2] : memref<128x128xbf16, #tpu.memory_space<vmem>>, vector<128x128xbf16>
    %c0_3 = arith.constant 0 : index
    %c0_4 = arith.constant 0 : index
    %2 = vector.load %arg2[%c0_3, %c0_4] : memref<128x128xbf16, #tpu.memory_space<vmem>>, vector<128x128xbf16>
    %cst = arith.constant dense<0.000000e+00> : vector<128x128xf32>
    %3 = tpu.matmul %1, %2, %cst {dimension_numbers = #tpu.dot_dimension_numbers<[1], [0], [0], [1], [0, 0, 1, 1], [], []>} : vector<128x128xbf16>, vector<128x128xbf16>, vector<128x128xf32> -> vector<128x128xf32>
    %4 = arith.truncf %3 : vector<128x128xf32> to vector<128x128xbf16>
    %cst_5 = arith.constant dense<0.000000e+00> : vector<128x128xf32>
    %5 = tpu.matmul %0, %4, %cst_5 {dimension_numbers = #tpu.dot_dimension_numbers<[1], [0], [0], [1], [0, 0, 1, 1], [], []>} : vector<128x128xbf16>, vector<128x128xbf16>, vector<128x128xf32> -> vector<128x128xf32>
    %c0_6 = arith.constant 0 : index
    %c0_7 = arith.constant 0 : index
    %6 = vector.load %arg3[%c0_6, %c0_7] : memref<1x128xf32, #tpu.memory_space<vmem>>, vector<1x128xf32>
    %7 = vector.broadcast %6 : vector<1x128xf32> to vector<128x128xf32>
    %8 = arith.addf %5, %7 : vector<128x128xf32>
    %cst_8 = arith.constant 0.000000e+00 : f32
    %9 = vector.broadcast %cst_8 : f32 to vector<128x128xf32>
    %10 = arith.maximumf %8, %9 : vector<128x128xf32>
    %11 = arith.truncf %10 : vector<128x128xf32> to vector<128x128xbf16>
    %c0_9 = arith.constant 0 : index
    %c0_10 = arith.constant 0 : index
    %12 = vector.load %arg4[%c0_9, %c0_10] : memref<128x128xbf16, #tpu.memory_space<vmem>>, vector<128x128xbf16>
    %cst_11 = arith.constant dense<0.000000e+00> : vector<128x128xf32>
    %13 = tpu.matmul %11, %12, %cst_11 {dimension_numbers = #tpu.dot_dimension_numbers<[1], [0], [0], [1], [0, 0, 1, 1], [], []>} : vector<128x128xbf16>, vector<128x128xbf16>, vector<128x128xf32> -> vector<128x128xf32>
    %14 = arith.truncf %13 : vector<128x128xf32> to vector<128x128xbf16>
    %cst_12 = arith.constant dense<0.000000e+00> : vector<128x128xf32>
    %15 = tpu.matmul %0, %14, %cst_12 {dimension_numbers = #tpu.dot_dimension_numbers<[1], [0], [0], [1], [0, 0, 1, 1], [], []>} : vector<128x128xbf16>, vector<128x128xbf16>, vector<128x128xf32> -> vector<128x128xf32>
    %c0_13 = arith.constant 0 : index
    %c0_14 = arith.constant 0 : index
    %16 = vector.load %arg5[%c0_13, %c0_14] : memref<1x128xf32, #tpu.memory_space<vmem>>, vector<1x128xf32>
    %17 = vector.broadcast %16 : vector<1x128xf32> to vector<128x128xf32>
    %18 = arith.addf %15, %17 : vector<128x128xf32>
    %c0_15 = arith.constant 0 : index
    %c0_16 = arith.constant 0 : index
    %19 = vector.load %arg6[%c0_15, %c0_16] : memref<128x128xf32, #tpu.memory_space<vmem>>, vector<128x128xf32>
    tpu.vector_store %arg6[%c0_15, %c0_16], %18 {strides = array<i32>} : memref<128x128xf32, #tpu.memory_space<vmem>>, vector<128x128xf32>,
    return
  }
}

</mosaic_0001>

<llo_original>
// kernel: tpu_custom_call.1
$region0: #{tpu_custom_call.1}
  #allocation0 [shape = 'u32[]', space=smem, size = 0x4, offset = 0x4, fixed_abs, tag = 'smem constant byte address 0x4 - core index']
  #allocation1 [shape = 'u32[144,128]{1,0:T(1,128)}', space=vmem, size = 0x12000, scoped, tag = 'internal scratch']
  %s0 = inlined_call_operand.hbm [shape: bf16[128,128], index: 0, kind: input, shape index: {}]
  %s1 = inlined_call_operand.hbm [shape: bf16[128,128], index: 1, kind: input, shape index: {}]
  %s2 = inlined_call_operand.hbm [shape: bf16[128,128], index: 2, kind: input, shape index: {}]
  %s3 = inlined_call_operand.vmem [shape: f32[1,128], index: 3, kind: input, shape index: {}]
  %s4 = inlined_call_operand.hbm [shape: bf16[128,128], index: 4, kind: input, shape index: {}]
  %s5 = inlined_call_operand.vmem [shape: f32[1,128], index: 5, kind: input, shape index: {}]
  %s6 = inlined_call_operand.hbm [shape: f32[128,128], index: 6, kind: output, shape index: {}]
  %s7 = sld [smem:[#allocation0]]
  $region50: #{tpu_custom_call.1} parent=0
    _
  %s9 = ssub.s32 1, %s7
  %s10 = scalar_select 0, %s9, %s7
  $region1: #{tpu_custom_call.1} parent=0
    #allocation2 [shape = 'u8[32768]{0}', space=vmem, size = 0x8000, scoped, tag = 'input window, operand 0, single buffered']
    #allocation3 [shape = 's32[1]{0}', space=sflag, size = 0x4, scoped, tag = 'scoped memory for tpu_custom_call.1']
    #allocation4 [shape = 's32[1]{0}', space=sflag, size = 0x4, scoped, tag = 'scoped memory for tpu_custom_call.1']
    #allocation5 [shape = 'u8[32768]{0}', space=vmem, size = 0x8000, scoped, tag = 'input window, operand 1, single buffered']
    #allocation6 [shape = 's32[1]{0}', space=sflag, size = 0x4, scoped, tag = 'scoped memory for tpu_custom_call.1']
    #allocation7 [shape = 'u8[32768]{0}', space=vmem, size = 0x8000, scoped, tag = 'input window, operand 2, single buffered']
    #allocation8 [shape = 'u8[32768]{0}', space=vmem, size = 0x8000, scoped, tag = 'input window, operand 4, single buffered']
    #allocation9 [shape = 's32[1]{0}', space=sflag, size = 0x4, scoped, tag = 'scoped memory for tpu_custom_call.1']
    #allocation10 [shape = 'u8[65536]{0}', space=vmem, size = 0x10000, scoped, tag = 'output window, operand 0, single buffered']
    %11 = vsyncpa [#allocation3], 0
    %12 = vsyncpa [#allocation6], 0
    %13 = vsyncpa [#allocation9], 0
    %14 = vsyncpa [#allocation4], 0
    // Predicated region
    $region2: #{tpu_custom_call.1} parent=1 // pred_check
      _
    $region3: #{tpu_custom_call.1} parent=1 // pred_check_branch
      %16 = sbr.rel (0) target = $region5
    $region4: #{tpu_custom_call.1} parent=1 // pred_region
      %s18 = ssub.s32 1024, 1024
      %19 = vsyncadd [#allocation3], %s18
      %s20 = sshll.u32 [#allocation2], 4
      %s21 = int_to_ptr.vmem [resolvable:$true] %s20
      %26 = dma.hbm_to_vmem [thread:$0]  %s0, 1024, %s21, [#allocation3], 64, 64, 4
    $region5: #{tpu_custom_call.1} parent=1 // pred_fallthru
      _
    // Predicated region
    $region6: #{tpu_custom_call.1} parent=1 // pred_check
      _
    $region7: #{tpu_custom_call.1} parent=1 // pred_check_branch
      %28 = sbr.rel (0) target = $region9
    $region8: #{tpu_custom_call.1} parent=1 // pred_region
      %s30 = ssub.s32 1024, 1024
      %31 = vsyncadd [#allocation6], %s30
      %s32 = sshll.u32 [#allocation5], 4
      %s33 = int_to_ptr.vmem [resolvable:$true] %s32
      %38 = dma.hbm_to_vmem [thread:$0]  %s1, 1024, %s33, [#allocation6], 64, 64, 4
    $region9: #{tpu_custom_call.1} parent=1 // pred_fallthru
      _
    // Predicated region
    $region10: #{tpu_custom_call.1} parent=1 // pred_check
      _
    $region11: #{tpu_custom_call.1} parent=1 // pred_check_branch
      %40 = sbr.rel (0) target = $region13
    $region12: #{tpu_custom_call.1} parent=1 // pred_region
      %s42 = ssub.s32 1024, 1024
      %43 = vsyncadd [#allocation6], %s42
      %s44 = sshll.u32 [#allocation7], 4
      %s45 = int_to_ptr.vmem [resolvable:$true] %s44
      %50 = dma.hbm_to_vmem [thread:$0]  %s2, 1024, %s45, [#allocation6], 64, 64, 4
    $region13: #{tpu_custom_call.1} parent=1 // pred_fallthru
      _
    // Predicated region
    $region14: #{tpu_custom_call.1} parent=1 // pred_check
      _
    $region15: #{tpu_custom_call.1} parent=1 // pred_check_branch
      %52 = sbr.rel (0) target = $region17
    $region16: #{tpu_custom_call.1} parent=1 // pred_region
      _
    $region17: #{tpu_custom_call.1} parent=1 // pred_fallthru
      _
    // Predicated region
    $region18: #{tpu_custom_call.1} parent=1 // pred_check
      _
    $region19: #{tpu_custom_call.1} parent=1 // pred_check_branch
      %54 = sbr.rel (0) target = $region21
    $region20: #{tpu_custom_call.1} parent=1 // pred_region
      %s56 = ssub.s32 1024, 1024
      %57 = vsyncadd [#allocation9], %s56
      %s58 = sshll.u32 [#allocation8], 4
      %s59 = int_to_ptr.vmem [resolvable:$true] %s58
      %64 = dma.hbm_to_vmem [thread:$0]  %s4, 1024, %s59, [#allocation9], 64, 64, 4
    $region21: #{tpu_custom_call.1} parent=1 // pred_fallthru
      _
    // Predicated region
    $region22: #{tpu_custom_call.1} parent=1 // pred_check
      _
    $region23: #{tpu_custom_call.1} parent=1 // pred_check_branch
      %66 = sbr.rel (0) target = $region25
    $region24: #{tpu_custom_call.1} parent=1 // pred_region
      _
    $region25: #{tpu_custom_call.1} parent=1 // pred_fallthru
      _
    // Predicated region
    $region26: #{tpu_custom_call.1} parent=1 // pred_check
      _
    $region27: #{tpu_custom_call.1} parent=1 // pred_check_branch
      %68 = sbr.rel (0) target = $region29
    $region28: #{tpu_custom_call.1} parent=1 // pred_region
      %69 = dma.done [#allocation3], 1024
    $region29: #{tpu_custom_call.1} parent=1 // pred_fallthru
      _
    // Predicated region
    $region30: #{tpu_custom_call.1} parent=1 // pred_check
      _
    $region31: #{tpu_custom_call.1} parent=1 // pred_check_branch
      %71 = sbr.rel (0) target = $region33
    $region32: #{tpu_custom_call.1} parent=1 // pred_region
      %72 = dma.done [#allocation6], 1024
    $region33: #{tpu_custom_call.1} parent=1 // pred_fallthru
      _
    // Predicated region
    $region34: #{tpu_custom_call.1} parent=1 // pred_check
      _
    $region35: #{tpu_custom_call.1} parent=1 // pred_check_branch
      %74 = sbr.rel (0) target = $region37
    $region36: #{tpu_custom_call.1} parent=1 // pred_region
      %75 = dma.done [#allocation6], 1024
    $region37: #{tpu_custom_call.1} parent=1 // pred_fallthru
      _
    // Predicated region
    $region38: #{tpu_custom_call.1} parent=1 // pred_check
      _
    $region39: #{tpu_custom_call.1} parent=1 // pred_check_branch
      %77 = sbr.rel (0) target = $region41
    $region40: #{tpu_custom_call.1} parent=1 // pred_region
      %78 = dma.done [#allocation9], 1024
    $region41: #{tpu_custom_call.1} parent=1 // pred_fallthru
      _
    %v80 = vld [vmem:[#allocation2] sm:$0xf]
    %v81 = vld [vmem:[#allocation2 + $0x4] sm:$0xf]
    %v82 = vld [vmem:[#allocation2 + $0x8] sm:$0xf]
    %v83 = vld [vmem:[#allocation2 + $0xc] sm:$0xf]
    %v84 = vld [vmem:[#allocation2 + $0x10] sm:$0xf]
    %v85 = vld [vmem:[#allocation2 + $0x14] sm:$0xf]
    %v86 = vld [vmem:[#allocation2 + $0x18] sm:$0xf]
    %v87 = vld [vmem:[#allocation2 + $0x1c] sm:$0xf]
    %v88 = vld [vmem:[#allocation2 + $0x20] sm:$0xf]
    %v89 = vld [vmem:[#allocation2 + $0x24] sm:$0xf]
    %v90 = vld [vmem:[#allocation2 + $0x28] sm:$0xf]
    %v91 = vld [vmem:[#allocation2 + $0x2c] sm:$0xf]
    %v92 = vld [vmem:[#allocation2 + $0x30] sm:$0xf]
    %v93 = vld [vmem:[#allocation2 + $0x34] sm:$0xf]
    %v94 = vld [vmem:[#allocation2 + $0x38] sm:$0xf]
    %v95 = vld [vmem:[#allocation2 + $0x3c] sm:$0xf]
    %v96 = vld [vmem:[#allocation5] sm:$0xf]
    %v97 = vld [vmem:[#allocation5 + $0x4] sm:$0xf]
    %v98 = vld [vmem:[#allocation5 + $0x8] sm:$0xf]
    %v99 = vld [vmem:[#allocation5 + $0xc] sm:$0xf]
    %v100 = vld [vmem:[#allocation5 + $0x10] sm:$0xf]
    %v101 = vld [vmem:[#allocation5 + $0x14] sm:$0xf]
    %v102 = vld [vmem:[#allocation5 + $0x18] sm:$0xf]
    %v103 = vld [vmem:[#allocation5 + $0x1c] sm:$0xf]
    %v104 = vld [vmem:[#allocation5 + $0x20] sm:$0xf]
    %v105 = vld [vmem:[#allocation5 + $0x24] sm:$0xf]
    %v106 = vld [vmem:[#allocation5 + $0x28] sm:$0xf]
    %v107 = vld [vmem:[#allocation5 + $0x2c] sm:$0xf]
    %v108 = vld [vmem:[#allocation5 + $0x30] sm:$0xf]
    %v109 = vld [vmem:[#allocation5 + $0x34] sm:$0xf]
    %v110 = vld [vmem:[#allocation5 + $0x38] sm:$0xf]
    %v111 = vld [vmem:[#allocation5 + $0x3c] sm:$0xf]
    %v112 = vld [vmem:[#allocation7] sm:$0xf]
    %v113 = vld [vmem:[#allocation7 + $0x4] sm:$0xf]
    %v114 = vld [vmem:[#allocation7 + $0x8] sm:$0xf]
    %v115 = vld [vmem:[#allocation7 + $0xc] sm:$0xf]
    %v116 = vld [vmem:[#allocation7 + $0x10] sm:$0xf]
    %v117 = vld [vmem:[#allocation7 + $0x14] sm:$0xf]
    %v118 = vld [vmem:[#allocation7 + $0x18] sm:$0xf]
    %v119 = vld [vmem:[#allocation7 + $0x1c] sm:$0xf]
    %v120 = vld [vmem:[#allocation7 + $0x20] sm:$0xf]
    %v121 = vld [vmem:[#allocation7 + $0x24] sm:$0xf]
    %v122 = vld [vmem:[#allocation7 + $0x28] sm:$0xf]
    %v123 = vld [vmem:[#allocation7 + $0x2c] sm:$0xf]
    %v124 = vld [vmem:[#allocation7 + $0x30] sm:$0xf]
    %v125 = vld [vmem:[#allocation7 + $0x34] sm:$0xf]
    %v126 = vld [vmem:[#allocation7 + $0x38] sm:$0xf]
    %v127 = vld [vmem:[#allocation7 + $0x3c] sm:$0xf]
    %v144 = vunpack.c.l.b16 %v96
    %v145 = vunpack.c.l.b16 %v97
    %v146 = vunpack.c.l.b16 %v98
    %v147 = vunpack.c.l.b16 %v99
    %v148 = vunpack.c.l.b16 %v100
    %v149 = vunpack.c.l.b16 %v101
    %v150 = vunpack.c.l.b16 %v102
    %v151 = vunpack.c.l.b16 %v103
    %v152 = vunpack.c.l.b16 %v104
    %v153 = vunpack.c.l.b16 %v105
    %v154 = vunpack.c.l.b16 %v106
    %v155 = vunpack.c.l.b16 %v107
    %v156 = vunpack.c.l.b16 %v108
    %v157 = vunpack.c.l.b16 %v109
    %v158 = vunpack.c.l.b16 %v110
    %v159 = vunpack.c.l.b16 %v111
    %v160 = vpack.c.b16 %v145, %v144
    %v161 = vpack.c.b16 %v147, %v146
    %v162 = vpack.c.b16 %v149, %v148
    %v163 = vpack.c.b16 %v151, %v150
    %v164 = vpack.c.b16 %v153, %v152
    %v165 = vpack.c.b16 %v155, %v154
    %v166 = vpack.c.b16 %v157, %v156
    %v167 = vpack.c.b16 %v159, %v158
    %v192 = vunpack.c.l.b16 %v112
    %v193 = vunpack.c.l.b16 %v113
    %v194 = vunpack.c.l.b16 %v114
    %v195 = vunpack.c.l.b16 %v115
    %v196 = vunpack.c.l.b16 %v116
    %v197 = vunpack.c.l.b16 %v117
    %v198 = vunpack.c.l.b16 %v118
    %v199 = vunpack.c.l.b16 %v119
    %v200 = vunpack.c.l.b16 %v120
    %v201 = vunpack.c.l.b16 %v121
    %v202 = vunpack.c.l.b16 %v122
    %v203 = vunpack.c.l.b16 %v123
    %v204 = vunpack.c.l.b16 %v124
    %v205 = vunpack.c.l.b16 %v125
    %v206 = vunpack.c.l.b16 %v126
    %v207 = vunpack.c.l.b16 %v127
    %v208 = vpack.c.b16 %v193, %v192
    %v209 = vpack.c.b16 %v195, %v194
    %v210 = vpack.c.b16 %v197, %v196
    %v211 = vpack.c.b16 %v199, %v198
    %v212 = vpack.c.b16 %v201, %v200
    %v213 = vpack.c.b16 %v203, %v202
    %v214 = vpack.c.b16 %v205, %v204
    %v215 = vpack.c.b16 %v207, %v206
    %224 = vmatprep.subr.bf16.mxu0 0
    %225 = vmatpush1.bf16.msra.mxu0 %v215
    %226 = vmatprep.subr.bf16.mxu0 0
    %227 = vmatpush1.bf16.msra.mxu0 %v214
    %228 = vmatprep.subr.bf16.mxu0 0
    %229 = vmatpush1.bf16.msra.mxu0 %v213
    %230 = vmatprep.subr.bf16.mxu0 0
    %231 = vmatpush1.bf16.msra.mxu0 %v212
    %232 = vmatprep.subr.bf16.mxu0 0
    %233 = vmatpush1.bf16.msra.mxu0 %v211
    %234 = vmatprep.subr.bf16.mxu0 0
    %235 = vmatpush1.bf16.msra.mxu0 %v210
    %236 = vmatprep.subr.bf16.mxu0 0
    %237 = vmatpush1.bf16.msra.mxu0 %v209
    %238 = vmatprep.subr.bf16.mxu0 0
    %239 = vmatpush1.bf16.msra.mxu0 %v208
    %240 = vmatprep.subr.bf16.mxu0 0
    %241 = vmatpush2.bf16.msra.mxu0 0
    %242 = vmatprep.subr.bf16.mxu0 0
    %243 = vmatpush2.bf16.msra.mxu0 0
    %244 = vmatprep.subr.bf16.mxu0 0
    %245 = vmatpush2.bf16.msra.mxu0 0
    %246 = vmatprep.subr.bf16.mxu0 0
    %247 = vmatpush2.bf16.msra.mxu0 0
    %248 = vmatprep.subr.bf16.mxu0 0
    %249 = vmatpush2.bf16.msra.mxu0 0
    %250 = vmatprep.subr.bf16.mxu0 0
    %251 = vmatpush2.bf16.msra.mxu0 0
    %252 = vmatprep.subr.bf16.mxu0 0
    %253 = vmatpush2.bf16.msra.mxu0 0
    %254 = vmatprep.subr.bf16.mxu0 0
    %255 = vmatpush2.bf16.msra.mxu0 0
    %256 = vmatprep.mubr.bf16.mxu0 0
    %257 = vmatmul.mubr.bf16.gmra.mxu0 %v160
    %v258 = vpop.f32.mrf.mxu0
    %v259 = vadd.f32 0.0, %v258
    %v260 = vpop.f32.mrf.mxu0
    %v261 = vpop.f32.mrf.mxu0
    %v262 = vadd.f32 0.0, %v261
    %v263 = vpop.f32.mrf.mxu0
    %264 = vmatprep.mubr.bf16.mxu0 0
    %265 = vmatmul.mubr.bf16.gmra.mxu0 %v161
    %v266 = vpop.f32.mrf.mxu0
    %v267 = vadd.f32 0.0, %v266
    %v268 = vpop.f32.mrf.mxu0
    %v269 = vpop.f32.mrf.mxu0
    %v270 = vadd.f32 0.0, %v269
    %v271 = vpop.f32.mrf.mxu0
    %272 = vmatprep.mubr.bf16.mxu0 0
    %273 = vmatmul.mubr.bf16.gmra.mxu0 %v162
    %v274 = vpop.f32.mrf.mxu0
    %v275 = vadd.f32 0.0, %v274
    %v276 = vpop.f32.mrf.mxu0
    %v277 = vpop.f32.mrf.mxu0
    %v278 = vadd.f32 0.0, %v277
    %v279 = vpop.f32.mrf.mxu0
    %280 = vmatprep.mubr.bf16.mxu0 0
    %281 = vmatmul.mubr.bf16.gmra.mxu0 %v163
    %v282 = vpop.f32.mrf.mxu0
    %v283 = vadd.f32 0.0, %v282
    %v284 = vpop.f32.mrf.mxu0
    %v285 = vpop.f32.mrf.mxu0
    %v286 = vadd.f32 0.0, %v285
    %v287 = vpop.f32.mrf.mxu0
    %288 = vmatprep.mubr.bf16.mxu0 0
    %289 = vmatmul.mubr.bf16.gmra.mxu0 %v164
    %v290 = vpop.f32.mrf.mxu0
    %v291 = vadd.f32 0.0, %v290
    %v292 = vpop.f32.mrf.mxu0
    %v293 = vpop.f32.mrf.mxu0
    %v294 = vadd.f32 0.0, %v293
    %v295 = vpop.f32.mrf.mxu0
    %296 = vmatprep.mubr.bf16.mxu0 0
    %297 = vmatmul.mubr.bf16.gmra.mxu0 %v165
    %v298 = vpop.f32.mrf.mxu0
    %v299 = vadd.f32 0.0, %v298
    %v300 = vpop.f32.mrf.mxu0
    %v301 = vpop.f32.mrf.mxu0
    %v302 = vadd.f32 0.0, %v301
    %v303 = vpop.f32.mrf.mxu0
    %304 = vmatprep.mubr.bf16.mxu0 0
    %305 = vmatmul.mubr.bf16.gmra.mxu0 %v166
    %v306 = vpop.f32.mrf.mxu0
    %v307 = vadd.f32 0.0, %v306
    %v308 = vpop.f32.mrf.mxu0
    %v309 = vpop.f32.mrf.mxu0
    %v310 = vadd.f32 0.0, %v309
    %v311 = vpop.f32.mrf.mxu0
    %312 = vmatprep.mubr.bf16.mxu0 0
    %313 = vmatmul.mubr.bf16.gmra.mxu0 %v167
    %v314 = vpop.f32.mrf.mxu0
    %v315 = vadd.f32 0.0, %v314
    %v316 = vpop.f32.mrf.mxu0
    %v317 = vpop.f32.mrf.mxu0
    %v318 = vadd.f32 0.0, %v317
    %v319 = vpop.f32.mrf.mxu0
    %320 = vdwg.mxu0
    %v321 = vpack.c.bf16 %v262, %v259
    %v322 = vpack.c.bf16 %v270, %v267
    %v323 = vpack.c.bf16 %v278, %v275
    %v324 = vpack.c.bf16 %v286, %v283
    %v325 = vpack.c.bf16 %v294, %v291
    %v326 = vpack.c.bf16 %v302, %v299
    %v327 = vpack.c.bf16 %v310, %v307
    %v328 = vpack.c.bf16 %v318, %v315
    %v329 = vld [vmem:[%s3] sm:$0x1]
    %v331 = vlaneseq
    %v332 = vshrl.u32 %v331, 7
    %v333 = vsub.s32 0, %v332
    %v334 = vrot.slane %v329, %v333
    %v352 = vunpack.c.l.b16 %v80
    %v353 = vunpack.c.l.b16 %v81
    %v354 = vunpack.c.l.b16 %v82
    %v355 = vunpack.c.l.b16 %v83
    %v356 = vunpack.c.l.b16 %v84
    %v357 = vunpack.c.l.b16 %v85
    %v358 = vunpack.c.l.b16 %v86
    %v359 = vunpack.c.l.b16 %v87
    %v360 = vunpack.c.l.b16 %v88
    %v361 = vunpack.c.l.b16 %v89
    %v362 = vunpack.c.l.b16 %v90
    %v363 = vunpack.c.l.b16 %v91
    %v364 = vunpack.c.l.b16 %v92
    %v365 = vunpack.c.l.b16 %v93
    %v366 = vunpack.c.l.b16 %v94
    %v367 = vunpack.c.l.b16 %v95
    %v368 = vpack.c.b16 %v353, %v352
    %v369 = vpack.c.b16 %v355, %v354
    %v370 = vpack.c.b16 %v357, %v356
    %v371 = vpack.c.b16 %v359, %v358
    %v372 = vpack.c.b16 %v361, %v360
    %v373 = vpack.c.b16 %v363, %v362
    %v374 = vpack.c.b16 %v365, %v364
    %v375 = vpack.c.b16 %v367, %v366
    %384 = vmatprep.subr.bf16.mxu0 0
    %385 = vmatpush1.bf16.msra.mxu0 %v328
    %386 = vmatprep.subr.bf16.mxu0 0
    %387 = vmatpush1.bf16.msra.mxu0 %v327
    %388 = vmatprep.subr.bf16.mxu0 0
    %389 = vmatpush1.bf16.msra.mxu0 %v326
    %390 = vmatprep.subr.bf16.mxu0 0
    %391 = vmatpush1.bf16.msra.mxu0 %v325
    %392 = vmatprep.subr.bf16.mxu0 0
    %393 = vmatpush1.bf16.msra.mxu0 %v324
    %394 = vmatprep.subr.bf16.mxu0 0
    %395 = vmatpush1.bf16.msra.mxu0 %v323
    %396 = vmatprep.subr.bf16.mxu0 0
    %397 = vmatpush1.bf16.msra.mxu0 %v322
    %398 = vmatprep.subr.bf16.mxu0 0
    %399 = vmatpush1.bf16.msra.mxu0 %v321
    %400 = vmatprep.subr.bf16.mxu0 0
    %401 = vmatpush2.bf16.msra.mxu0 0
    %402 = vmatprep.subr.bf16.mxu0 0
    %403 = vmatpush2.bf16.msra.mxu0 0
    %404 = vmatprep.subr.bf16.mxu0 0
    %405 = vmatpush2.bf16.msra.mxu0 0
    %406 = vmatprep.subr.bf16.mxu0 0
    %407 = vmatpush2.bf16.msra.mxu0 0
    %408 = vmatprep.subr.bf16.mxu0 0
    %409 = vmatpush2.bf16.msra.mxu0 0
    %410 = vmatprep.subr.bf16.mxu0 0
    %411 = vmatpush2.bf16.msra.mxu0 0
    %412 = vmatprep.subr.bf16.mxu0 0
    %413 = vmatpush2.bf16.msra.mxu0 0
    %414 = vmatprep.subr.bf16.mxu0 0
    %415 = vmatpush2.bf16.msra.mxu0 0
    %416 = vmatprep.mubr.bf16.mxu0 0
    %417 = vmatmul.mubr.bf16.gmra.mxu0 %v368
    %v418 = vpop.f32.mrf.mxu0
    %v419 = vadd.f32 %v334, %v418
    %v420 = vpop.f32.mrf.mxu0
    %v421 = vpop.f32.mrf.mxu0
    %v422 = vadd.f32 %v334, %v421
    %v423 = vpop.f32.mrf.mxu0
    %424 = vmatprep.mubr.bf16.mxu0 0
    %425 = vmatmul.mubr.bf16.gmra.mxu0 %v369
    %v426 = vpop.f32.mrf.mxu0
    %v427 = vadd.f32 %v334, %v426
    %v428 = vpop.f32.mrf.mxu0
    %v429 = vpop.f32.mrf.mxu0
    %v430 = vadd.f32 %v334, %v429
    %v431 = vpop.f32.mrf.mxu0
    %432 = vmatprep.mubr.bf16.mxu0 0
    %433 = vmatmul.mubr.bf16.gmra.mxu0 %v370
    %v434 = vpop.f32.mrf.mxu0
    %v435 = vadd.f32 %v334, %v434
    %v436 = vpop.f32.mrf.mxu0
    %v437 = vpop.f32.mrf.mxu0
    %v438 = vadd.f32 %v334, %v437
    %v439 = vpop.f32.mrf.mxu0
    %440 = vmatprep.mubr.bf16.mxu0 0
    %441 = vmatmul.mubr.bf16.gmra.mxu0 %v371
    %v442 = vpop.f32.mrf.mxu0
    %v443 = vadd.f32 %v334, %v442
    %v444 = vpop.f32.mrf.mxu0
    %v445 = vpop.f32.mrf.mxu0
    %v446 = vadd.f32 %v334, %v445
    %v447 = vpop.f32.mrf.mxu0
    %448 = vmatprep.mubr.bf16.mxu0 0
    %449 = vmatmul.mubr.bf16.gmra.mxu0 %v372
    %v450 = vpop.f32.mrf.mxu0
    %v451 = vadd.f32 %v334, %v450
    %v452 = vpop.f32.mrf.mxu0
    %v453 = vpop.f32.mrf.mxu0
    %v454 = vadd.f32 %v334, %v453
    %v455 = vpop.f32.mrf.mxu0
    %456 = vmatprep.mubr.bf16.mxu0 0
    %457 = vmatmul.mubr.bf16.gmra.mxu0 %v373
    %v458 = vpop.f32.mrf.mxu0
    %v459 = vadd.f32 %v334, %v458
    %v460 = vpop.f32.mrf.mxu0
    %v461 = vpop.f32.mrf.mxu0
    %v462 = vadd.f32 %v334, %v461
    %v463 = vpop.f32.mrf.mxu0
    %464 = vmatprep.mubr.bf16.mxu0 0
    %465 = vmatmul.mubr.bf16.gmra.mxu0 %v374
    %v466 = vpop.f32.mrf.mxu0
    %v467 = vadd.f32 %v334, %v466
    %v468 = vpop.f32.mrf.mxu0
    %v469 = vpop.f32.mrf.mxu0
    %v470 = vadd.f32 %v334, %v469
    %v471 = vpop.f32.mrf.mxu0
    %472 = vmatprep.mubr.bf16.mxu0 0
    %473 = vmatmul.mubr.bf16.gmra.mxu0 %v375
    %v474 = vpop.f32.mrf.mxu0
    %v475 = vadd.f32 %v334, %v474
    %v476 = vpop.f32.mrf.mxu0
    %v477 = vpop.f32.mrf.mxu0
    %v478 = vadd.f32 %v334, %v477
    %v479 = vpop.f32.mrf.mxu0
    %480 = vdwg.mxu0
    %v481 = vmax.f32 %v419, 0.0
    %v482 = vmax.f32 %v422, 0.0
    %v483 = vmax.f32 %v427, 0.0
    %v484 = vmax.f32 %v430, 0.0
    %v485 = vmax.f32 %v435, 0.0
    %v486 = vmax.f32 %v438, 0.0
    %v487 = vmax.f32 %v443, 0.0
    %v488 = vmax.f32 %v446, 0.0
    %v489 = vmax.f32 %v451, 0.0
    %v490 = vmax.f32 %v454, 0.0
    %v491 = vmax.f32 %v459, 0.0
    %v492 = vmax.f32 %v462, 0.0
    %v493 = vmax.f32 %v467, 0.0
    %v494 = vmax.f32 %v470, 0.0
    %v495 = vmax.f32 %v475, 0.0
    %v496 = vmax.f32 %v478, 0.0
    %v497 = vpack.c.bf16 %v482, %v481
    %v498 = vpack.c.bf16 %v484, %v483
    %v499 = vpack.c.bf16 %v486, %v485
    %v500 = vpack.c.bf16 %v488, %v487
    %v501 = vpack.c.bf16 %v490, %v489
    %v502 = vpack.c.bf16 %v492, %v491
    %v503 = vpack.c.bf16 %v494, %v493
    %v504 = vpack.c.bf16 %v496, %v495
    %v505 = vld [vmem:[#allocation8] sm:$0xf]
    %v506 = vld [vmem:[#allocation8 + $0x4] sm:$0xf]
    %v507 = vld [vmem:[#allocation8 + $0x8] sm:$0xf]
    %v508 = vld [vmem:[#allocation8 + $0xc] sm:$0xf]
    %v509 = vld [vmem:[#allocation8 + $0x10] sm:$0xf]
    %v510 = vld [vmem:[#allocation8 + $0x14] sm:$0xf]
    %v511 = vld [vmem:[#allocation8 + $0x18] sm:$0xf]
    %v512 = vld [vmem:[#allocation8 + $0x1c] sm:$0xf]
    %v513 = vld [vmem:[#allocation8 + $0x20] sm:$0xf]
    %v514 = vld [vmem:[#allocation8 + $0x24] sm:$0xf]
    %v515 = vld [vmem:[#allocation8 + $0x28] sm:$0xf]
    %v516 = vld [vmem:[#allocation8 + $0x2c] sm:$0xf]
    %v517 = vld [vmem:[#allocation8 + $0x30] sm:$0xf]
    %v518 = vld [vmem:[#allocation8 + $0x34] sm:$0xf]
    %v519 = vld [vmem:[#allocation8 + $0x38] sm:$0xf]
    %v520 = vld [vmem:[#allocation8 + $0x3c] sm:$0xf]
    %v537 = vunpack.c.l.b16 %v505
    %v538 = vunpack.c.l.b16 %v506
    %v539 = vunpack.c.l.b16 %v507
    %v540 = vunpack.c.l.b16 %v508
    %v541 = vunpack.c.l.b16 %v509
    %v542 = vunpack.c.l.b16 %v510
    %v543 = vunpack.c.l.b16 %v511
    %v544 = vunpack.c.l.b16 %v512
    %v545 = vunpack.c.l.b16 %v513
    %v546 = vunpack.c.l.b16 %v514
    %v547 = vunpack.c.l.b16 %v515
    %v548 = vunpack.c.l.b16 %v516
    %v549 = vunpack.c.l.b16 %v517
    %v550 = vunpack.c.l.b16 %v518
    %v551 = vunpack.c.l.b16 %v519
    %v552 = vunpack.c.l.b16 %v520
    %v553 = vpack.c.b16 %v538, %v537
    %v554 = vpack.c.b16 %v540, %v539
    %v555 = vpack.c.b16 %v542, %v541
    %v556 = vpack.c.b16 %v544, %v543
    %v557 = vpack.c.b16 %v546, %v545
    %v558 = vpack.c.b16 %v548, %v547
    %v559 = vpack.c.b16 %v550, %v549
    %v560 = vpack.c.b16 %v552, %v551
    %569 = vmatprep.subr.bf16.mxu0 0
    %570 = vmatpush1.bf16.msra.mxu0 %v560
    %571 = vmatprep.subr.bf16.mxu0 0
    %572 = vmatpush1.bf16.msra.mxu0 %v559
    %573 = vmatprep.subr.bf16.mxu0 0
    %574 = vmatpush1.bf16.msra.mxu0 %v558
    %575 = vmatprep.subr.bf16.mxu0 0
    %576 = vmatpush1.bf16.msra.mxu0 %v557
    %577 = vmatprep.subr.bf16.mxu0 0
    %578 = vmatpush1.bf16.msra.mxu0 %v556
    %579 = vmatprep.subr.bf16.mxu0 0
    %580 = vmatpush1.bf16.msra.mxu0 %v555
    %581 = vmatprep.subr.bf16.mxu0 0
    %582 = vmatpush1.bf16.msra.mxu0 %v554
    %583 = vmatprep.subr.bf16.mxu0 0
    %584 = vmatpush1.bf16.msra.mxu0 %v553
    %585 = vmatprep.subr.bf16.mxu0 0
    %586 = vmatpush2.bf16.msra.mxu0 0
    %587 = vmatprep.subr.bf16.mxu0 0
    %588 = vmatpush2.bf16.msra.mxu0 0
    %589 = vmatprep.subr.bf16.mxu0 0
    %590 = vmatpush2.bf16.msra.mxu0 0
    %591 = vmatprep.subr.bf16.mxu0 0
    %592 = vmatpush2.bf16.msra.mxu0 0
    %593 = vmatprep.subr.bf16.mxu0 0
    %594 = vmatpush2.bf16.msra.mxu0 0
    %595 = vmatprep.subr.bf16.mxu0 0
    %596 = vmatpush2.bf16.msra.mxu0 0
    %597 = vmatprep.subr.bf16.mxu0 0
    %598 = vmatpush2.bf16.msra.mxu0 0
    %599 = vmatprep.subr.bf16.mxu0 0
    %600 = vmatpush2.bf16.msra.mxu0 0
    %601 = vmatprep.mubr.bf16.mxu0 0
    %602 = vmatmul.mubr.bf16.gmra.mxu0 %v497
    %v603 = vpop.f32.mrf.mxu0
    %v604 = vadd.f32 0.0, %v603
    %v605 = vpop.f32.mrf.mxu0
    %v606 = vpop.f32.mrf.mxu0
    %v607 = vadd.f32 0.0, %v606
    %v608 = vpop.f32.mrf.mxu0
    %609 = vmatprep.mubr.bf16.mxu0 0
    %610 = vmatmul.mubr.bf16.gmra.mxu0 %v498
    %v611 = vpop.f32.mrf.mxu0
    %v612 = vadd.f32 0.0, %v611
    %v613 = vpop.f32.mrf.mxu0
    %v614 = vpop.f32.mrf.mxu0
    %v615 = vadd.f32 0.0, %v614
    %v616 = vpop.f32.mrf.mxu0
    %617 = vmatprep.mubr.bf16.mxu0 0
    %618 = vmatmul.mubr.bf16.gmra.mxu0 %v499
    %v619 = vpop.f32.mrf.mxu0
    %v620 = vadd.f32 0.0, %v619
    %v621 = vpop.f32.mrf.mxu0
    %v622 = vpop.f32.mrf.mxu0
    %v623 = vadd.f32 0.0, %v622
    %v624 = vpop.f32.mrf.mxu0
    %625 = vmatprep.mubr.bf16.mxu0 0
    %626 = vmatmul.mubr.bf16.gmra.mxu0 %v500
    %v627 = vpop.f32.mrf.mxu0
    %v628 = vadd.f32 0.0, %v627
    %v629 = vpop.f32.mrf.mxu0
    %v630 = vpop.f32.mrf.mxu0
    %v631 = vadd.f32 0.0, %v630
    %v632 = vpop.f32.mrf.mxu0
    %633 = vmatprep.mubr.bf16.mxu0 0
    %634 = vmatmul.mubr.bf16.gmra.mxu0 %v501
    %v635 = vpop.f32.mrf.mxu0
    %v636 = vadd.f32 0.0, %v635
    %v637 = vpop.f32.mrf.mxu0
    %v638 = vpop.f32.mrf.mxu0
    %v639 = vadd.f32 0.0, %v638
    %v640 = vpop.f32.mrf.mxu0
    %641 = vmatprep.mubr.bf16.mxu0 0
    %642 = vmatmul.mubr.bf16.gmra.mxu0 %v502
    %v643 = vpop.f32.mrf.mxu0
    %v644 = vadd.f32 0.0, %v643
    %v645 = vpop.f32.mrf.mxu0
    %v646 = vpop.f32.mrf.mxu0
    %v647 = vadd.f32 0.0, %v646
    %v648 = vpop.f32.mrf.mxu0
    %649 = vmatprep.mubr.bf16.mxu0 0
    %650 = vmatmul.mubr.bf16.gmra.mxu0 %v503
    %v651 = vpop.f32.mrf.mxu0
    %v652 = vadd.f32 0.0, %v651
    %v653 = vpop.f32.mrf.mxu0
    %v654 = vpop.f32.mrf.mxu0
    %v655 = vadd.f32 0.0, %v654
    %v656 = vpop.f32.mrf.mxu0
    %657 = vmatprep.mubr.bf16.mxu0 0
    %658 = vmatmul.mubr.bf16.gmra.mxu0 %v504
    %v659 = vpop.f32.mrf.mxu0
    %v660 = vadd.f32 0.0, %v659
    %v661 = vpop.f32.mrf.mxu0
    %v662 = vpop.f32.mrf.mxu0
    %v663 = vadd.f32 0.0, %v662
    %v664 = vpop.f32.mrf.mxu0
    %665 = vdwg.mxu0
    %v666 = vpack.c.bf16 %v607, %v604
    %v667 = vpack.c.bf16 %v615, %v612
    %v668 = vpack.c.bf16 %v623, %v620
    %v669 = vpack.c.bf16 %v631, %v628
    %v670 = vpack.c.bf16 %v639, %v636
    %v671 = vpack.c.bf16 %v647, %v644
    %v672 = vpack.c.bf16 %v655, %v652
    %v673 = vpack.c.bf16 %v663, %v660
    %v674 = vld [vmem:[%s5] sm:$0x1]
    %v676 = vlaneseq
    %v677 = vshrl.u32 %v676, 7
    %v678 = vsub.s32 0, %v677
    %v679 = vrot.slane %v674, %v678
    %681 = vmatprep.subr.bf16.mxu0 0
    %682 = vmatpush1.bf16.msra.mxu0 %v673
    %683 = vmatprep.subr.bf16.mxu0 0
    %684 = vmatpush1.bf16.msra.mxu0 %v672
    %685 = vmatprep.subr.bf16.mxu0 0
    %686 = vmatpush1.bf16.msra.mxu0 %v671
    %687 = vmatprep.subr.bf16.mxu0 0
    %688 = vmatpush1.bf16.msra.mxu0 %v670
    %689 = vmatprep.subr.bf16.mxu0 0
    %690 = vmatpush1.bf16.msra.mxu0 %v669
    %691 = vmatprep.subr.bf16.mxu0 0
    %692 = vmatpush1.bf16.msra.mxu0 %v668
    %693 = vmatprep.subr.bf16.mxu0 0
    %694 = vmatpush1.bf16.msra.mxu0 %v667
    %695 = vmatprep.subr.bf16.mxu0 0
    %696 = vmatpush1.bf16.msra.mxu0 %v666
    %697 = vmatprep.subr.bf16.mxu0 0
    %698 = vmatpush2.bf16.msra.mxu0 0
    %699 = vmatprep.subr.bf16.mxu0 0
    %700 = vmatpush2.bf16.msra.mxu0 0
    %701 = vmatprep.subr.bf16.mxu0 0
    %702 = vmatpush2.bf16.msra.mxu0 0
    %703 = vmatprep.subr.bf16.mxu0 0
    %704 = vmatpush2.bf16.msra.mxu0 0
    %705 = vmatprep.subr.bf16.mxu0 0
    %706 = vmatpush2.bf16.msra.mxu0 0
    %707 = vmatprep.subr.bf16.mxu0 0
    %708 = vmatpush2.bf16.msra.mxu0 0
    %709 = vmatprep.subr.bf16.mxu0 0
    %710 = vmatpush2.bf16.msra.mxu0 0
    %711 = vmatprep.subr.bf16.mxu0 0
    %712 = vmatpush2.bf16.msra.mxu0 0
    %713 = vmatprep.mubr.bf16.mxu0 0
    %714 = vmatmul.mubr.bf16.gmra.mxu0 %v368
    %v715 = vpop.f32.mrf.mxu0
    %v716 = vadd.f32 %v679, %v715
    %v717 = vpop.f32.mrf.mxu0
    %v718 = vpop.f32.mrf.mxu0
    %v719 = vadd.f32 %v679, %v718
    %v720 = vpop.f32.mrf.mxu0
    %721 = vmatprep.mubr.bf16.mxu0 0
    %722 = vmatmul.mubr.bf16.gmra.mxu0 %v369
    %v723 = vpop.f32.mrf.mxu0
    %v724 = vadd.f32 %v679, %v723
    %v725 = vpop.f32.mrf.mxu0
    %v726 = vpop.f32.mrf.mxu0
    %v727 = vadd.f32 %v679, %v726
    %v728 = vpop.f32.mrf.mxu0
    %729 = vmatprep.mubr.bf16.mxu0 0
    %730 = vmatmul.mubr.bf16.gmra.mxu0 %v370
    %v731 = vpop.f32.mrf.mxu0
    %v732 = vadd.f32 %v679, %v731
    %v733 = vpop.f32.mrf.mxu0
    %v734 = vpop.f32.mrf.mxu0
    %v735 = vadd.f32 %v679, %v734
    %v736 = vpop.f32.mrf.mxu0
    %737 = vmatprep.mubr.bf16.mxu0 0
    %738 = vmatmul.mubr.bf16.gmra.mxu0 %v371
    %v739 = vpop.f32.mrf.mxu0
    %v740 = vadd.f32 %v679, %v739
    %v741 = vpop.f32.mrf.mxu0
    %v742 = vpop.f32.mrf.mxu0
    %v743 = vadd.f32 %v679, %v742
    %v744 = vpop.f32.mrf.mxu0
    %745 = vmatprep.mubr.bf16.mxu0 0
    %746 = vmatmul.mubr.bf16.gmra.mxu0 %v372
    %v747 = vpop.f32.mrf.mxu0
    %v748 = vadd.f32 %v679, %v747
    %v749 = vpop.f32.mrf.mxu0
    %v750 = vpop.f32.mrf.mxu0
    %v751 = vadd.f32 %v679, %v750
    %v752 = vpop.f32.mrf.mxu0
    %753 = vmatprep.mubr.bf16.mxu0 0
    %754 = vmatmul.mubr.bf16.gmra.mxu0 %v373
    %v755 = vpop.f32.mrf.mxu0
    %v756 = vadd.f32 %v679, %v755
    %v757 = vpop.f32.mrf.mxu0
    %v758 = vpop.f32.mrf.mxu0
    %v759 = vadd.f32 %v679, %v758
    %v760 = vpop.f32.mrf.mxu0
    %761 = vmatprep.mubr.bf16.mxu0 0
    %762 = vmatmul.mubr.bf16.gmra.mxu0 %v374
    %v763 = vpop.f32.mrf.mxu0
    %v764 = vadd.f32 %v679, %v763
    %v765 = vpop.f32.mrf.mxu0
    %v766 = vpop.f32.mrf.mxu0
    %v767 = vadd.f32 %v679, %v766
    %v768 = vpop.f32.mrf.mxu0
    %769 = vmatprep.mubr.bf16.mxu0 0
    %770 = vmatmul.mubr.bf16.gmra.mxu0 %v375
    %v771 = vpop.f32.mrf.mxu0
    %v772 = vadd.f32 %v679, %v771
    %v773 = vpop.f32.mrf.mxu0
    %v774 = vpop.f32.mrf.mxu0
    %v775 = vadd.f32 %v679, %v774
    %v776 = vpop.f32.mrf.mxu0
    %777 = vdwg.mxu0
    %778 = vst [vmem:[#allocation10] sm:$0xff] %v716
    %779 = vst [vmem:[#allocation10 + $0x8] sm:$0xff] %v719
    %780 = vst [vmem:[#allocation10 + $0x10] sm:$0xff] %v724
    %781 = vst [vmem:[#allocation10 + $0x18] sm:$0xff] %v727
    %782 = vst [vmem:[#allocation10 + $0x20] sm:$0xff] %v732
    %783 = vst [vmem:[#allocation10 + $0x28] sm:$0xff] %v735
    %784 = vst [vmem:[#allocation10 + $0x30] sm:$0xff] %v740
    %785 = vst [vmem:[#allocation10 + $0x38] sm:$0xff] %v743
    %786 = vst [vmem:[#allocation10 + $0x40] sm:$0xff] %v748
    %787 = vst [vmem:[#allocation10 + $0x48] sm:$0xff] %v751
    %788 = vst [vmem:[#allocation10 + $0x50] sm:$0xff] %v756
    %789 = vst [vmem:[#allocation10 + $0x58] sm:$0xff] %v759
    %790 = vst [vmem:[#allocation10 + $0x60] sm:$0xff] %v764
    %791 = vst [vmem:[#allocation10 + $0x68] sm:$0xff] %v767
    %792 = vst [vmem:[#allocation10 + $0x70] sm:$0xff] %v772
    %793 = vst [vmem:[#allocation10 + $0x78] sm:$0xff] %v775
    // Predicated region
    $region42: #{tpu_custom_call.1} parent=1 // pred_check
      _
    $region43: #{tpu_custom_call.1} parent=1 // pred_check_branch
      %795 = sbr.rel (0) target = $region45
    $region44: #{tpu_custom_call.1} parent=1 // pred_region
      %s797 = ssub.s32 2048, 2048
      %798 = vsyncadd [#allocation4], %s797
      %s799 = sshll.u32 [#allocation10], 4
      %s800 = int_to_ptr.vmem [resolvable:$true] %s799
      %805 = dma.vmem_to_hbm [thread:$0]  %s800, 2048, %s6, [#allocation4], 128, 128, 8
    $region45: #{tpu_custom_call.1} parent=1 // pred_fallthru
      _
    // Predicated region
    $region46: #{tpu_custom_call.1} parent=1 // pred_check
      _
    $region47: #{tpu_custom_call.1} parent=1 // pred_check_branch
      %807 = sbr.rel (0) target = $region49
    $region48: #{tpu_custom_call.1} parent=1 // pred_region
      %808 = dma.done [#allocation4], 2048
    $region49: #{tpu_custom_call.1} parent=1 // pred_fallthru
      _
    %809 = vsyncpa [#allocation3], 1
    %810 = vsyncpa [#allocation6], 1
    %811 = vsyncpa [#allocation9], 1
    %812 = vsyncpa [#allocation4], 1

</llo_original>
